<compile_context>
chip_gen: v7x
topology: tpu7x:2x2x1
jax: 0.10.0
libtpu: 0.0.40
codegen_flags: <defaults>
</compile_context>

<pallas_src>
import numpy as np
import jax
import jax.numpy as jnp
from jax.experimental import pallas as pl
from jax.experimental.pallas import tpu as pltpu


def node_mlp_kernel(coll_ref, w1_ref, b1_ref, w2_ref, b2_ref,
                    gamma_ref, beta_ref, out_ref):
    # Fused first linear: collected = [x | agg] was pre-concatenated in the wrapper,
    # so this is a single K=(F+Fe) MXU matmul.
    h = jnp.dot(coll_ref[...], w1_ref[...],
                preferred_element_type=jnp.float32) + b1_ref[...]
    h = jnp.maximum(h, 0.0)                                           # ReLU
    y = jnp.dot(h, w2_ref[...],
                preferred_element_type=jnp.float32) + b2_ref[...]
    # LayerNorm over the feature (lane) axis, eps matches torch default 1e-5.
    mean = jnp.mean(y, axis=-1, keepdims=True)
    var = jnp.mean((y - mean) ** 2, axis=-1, keepdims=True)
    y_norm = (y - mean) * jax.lax.rsqrt(var + 1e-5)
    out_ref[...] = y_norm * gamma_ref[...] + beta_ref[...]


def _choose_tile_n(n, max_tile):
    """Largest node tile (multiple of 8, <= max_tile) that still gives >= 2 grid steps."""
    if n <= 8:
        return 8
    half = -(-n // 2)              # ceil(n / 2)
    tile = -(-half // 8) * 8       # round up to a multiple of 8
    return min(max_tile, tile)


def node_block_forward(node_attr, edge_index, edge_attr, params, *, max_tile_n=512):
    """Pallas implementation of NodeBlock.forward. Returns a dict mirroring Data(...)."""
    receivers_idx = edge_index[1]
    N, F = node_attr.shape
    Fe = edge_attr.shape[1]
    H = params["b1"].shape[-1]
    Ho = params["b2"].shape[-1]

    # scatter_add(edge_attr, receivers_idx, dim_size=N)  -- glue, plain JAX/XLA.
    agg = jnp.zeros((N, Fe), dtype=edge_attr.dtype).at[receivers_idx].add(edge_attr)

    # Pre-concatenate [x | agg] so the kernel does ONE fused first matmul (K = F + Fe).
    collected = jnp.concatenate([node_attr, agg], axis=-1)            # [N, F+Fe]

    # Large node tiles; pad N to the tile multiple instead of asserting divisibility.
    tile_n = _choose_tile_n(N, max_tile_n)
    n_pad = -(-N // tile_n) * tile_n
    if n_pad != N:
        collected = jnp.pad(collected, ((0, n_pad - N), (0, 0)))

    grid = (n_pad // tile_n,)
    K = F + Fe

    def row_map(i):
        return (i, 0)

    def full_map(i):
        return (0, 0)

    out = pl.pallas_call(
        node_mlp_kernel,
        out_shape=jax.ShapeDtypeStruct((n_pad, Ho), jnp.float32),
        grid_spec=pltpu.PrefetchScalarGridSpec(
            num_scalar_prefetch=0,
            grid=grid,
            in_specs=[
                pl.BlockSpec((tile_n, K), row_map),   # [x | agg] streamed tiles
                pl.BlockSpec((K, H), full_map),       # W1 (grid-invariant, resident)
                pl.BlockSpec((1, H), full_map),       # b1
                pl.BlockSpec((H, Ho), full_map),      # W2
                pl.BlockSpec((1, Ho), full_map),      # b2
                pl.BlockSpec((1, Ho), full_map),      # gamma
                pl.BlockSpec((1, Ho), full_map),      # beta
            ],
            out_specs=pl.BlockSpec((tile_n, Ho), row_map),
        ),
        compiler_params=pltpu.CompilerParams(
            dimension_semantics=("parallel",)),
    )(collected, params["w1"], params["b1"], params["w2"], params["b2"],
      params["gamma"], params["beta"])

    x_new = out[:N]

    # Mirrors: Data(x=x_new, edge_attr=edge_attr, edge_index=edge_index)
    return {"x": x_new, "edge_attr": edge_attr, "edge_index": edge_index}


def reference_forward(node_attr, edge_index, edge_attr, params):
    """Pure-JAX reference for correctness checking."""
    N = node_attr.shape[0]
    agg = jnp.zeros((N, edge_attr.shape[1]),
                    dtype=edge_attr.dtype).at[edge_index[1]].add(edge_attr)
    collected = jnp.concatenate([node_attr, agg], axis=-1)
    h = jnp.maximum(collected @ params["w1"] + params["b1"], 0.0)
    y = h @ params["w2"] + params["b2"]
    mean = jnp.mean(y, axis=-1, keepdims=True)
    var = jnp.mean((y - mean) ** 2, axis=-1, keepdims=True)
    return (y - mean) * jax.lax.rsqrt(var + 1e-5) * params["gamma"] + params["beta"]


if __name__ == "__main__":
    key = jax.random.PRNGKey(0)
    k_node, k_edge, k_ri, k_si, kw1, kw2, kb1, kb2 = jax.random.split(key, 8)

    N = 64           # number of nodes
    E = 256          # number of edges
    F = 32           # node feature dim
    Fe = 32          # edge feature dim
    H = 32           # hidden / output dim of the node MLP

    node_attr = jax.random.normal(k_node, (N, F), dtype=jnp.float32)
    edge_attr = jax.random.normal(k_edge, (E, Fe), dtype=jnp.float32)
    senders_idx = jax.random.randint(k_si, (E,), 0, N, dtype=jnp.int32)
    receivers_idx = jax.random.randint(k_ri, (E,), 0, N, dtype=jnp.int32)
    edge_index = jnp.stack([senders_idx, receivers_idx], axis=0)      # [2, E]

    # net = Linear(F+Fe, H) -> ReLU -> Linear(H, H) -> LayerNorm(H)
    params = {
        "w1": jax.random.normal(kw1, (F + Fe, H), dtype=jnp.float32) * 0.1,
        "b1": jax.random.normal(kb1, (1, H), dtype=jnp.float32) * 0.1,
        "w2": jax.random.normal(kw2, (H, H), dtype=jnp.float32) * 0.1,
        "b2": jax.random.normal(kb2, (1, H), dtype=jnp.float32) * 0.1,
        "gamma": jnp.ones((1, H), dtype=jnp.float32),
        "beta": jnp.zeros((1, H), dtype=jnp.float32),
    }

    out_graph = node_block_forward(node_attr, edge_index, edge_attr, params)
    x_new = jax.block_until_ready(out_graph["x"])

    ref = np.asarray(reference_forward(node_attr, edge_index, edge_attr, params))
    got = np.asarray(x_new)
    assert got.shape == (N, H), got.shape
    assert np.allclose(got, ref, atol=1e-3, rtol=1e-3), \
        f"max abs err {np.max(np.abs(got - ref))}"

    print("KERNEL_OK")
</pallas_src>

<mosaic_0001>
module attributes {stable_mosaic.version = 11 : i64} {
  func.func @node_mlp_kernel(%arg0: i32, %arg1: memref<32x64xf32, #tpu.memory_space<vmem>>, %arg2: memref<64x32xf32, #tpu.memory_space<vmem>>, %arg3: memref<1x32xf32, #tpu.memory_space<vmem>>, %arg4: memref<32x32xf32, #tpu.memory_space<vmem>>, %arg5: memref<1x32xf32, #tpu.memory_space<vmem>>, %arg6: memref<1x32xf32, #tpu.memory_space<vmem>>, %arg7: memref<1x32xf32, #tpu.memory_space<vmem>>, %arg8: memref<32x32xf32, #tpu.memory_space<vmem>>) attributes {dimension_semantics = [#tpu.dimension_semantics<parallel>], iteration_bounds = array<i64: 2>, scalar_prefetch = 0 : i64, scratch_operands = 0 : i64, tpu.core_type = #tpu.core_type<tc>, window_params = [{transform_indices = @transform_0, window_bounds = array<i64: 32, 64>}, {pipeline_mode = #tpu.pipeline_mode<synchronous>, transform_indices = @transform_1, window_bounds = array<i64: 64, 32>}, {pipeline_mode = #tpu.pipeline_mode<synchronous>, transform_indices = @transform_2, window_bounds = array<i64: 1, 32>}, {pipeline_mode = #tpu.pipeline_mode<synchronous>, transform_indices = @transform_3, window_bounds = array<i64: 32, 32>}, {pipeline_mode = #tpu.pipeline_mode<synchronous>, transform_indices = @transform_4, window_bounds = array<i64: 1, 32>}, {pipeline_mode = #tpu.pipeline_mode<synchronous>, transform_indices = @transform_5, window_bounds = array<i64: 1, 32>}, {pipeline_mode = #tpu.pipeline_mode<synchronous>, transform_indices = @transform_6, window_bounds = array<i64: 1, 32>}, {transform_indices = @transform_7, window_bounds = array<i64: 32, 32>}]} {
    %c0 = arith.constant 0 : index
    %c0_0 = arith.constant 0 : index
    %0 = vector.load %arg1[%c0, %c0_0] : memref<32x64xf32, #tpu.memory_space<vmem>>, vector<32x64xf32>
    %c0_1 = arith.constant 0 : index
    %c0_2 = arith.constant 0 : index
    %1 = vector.load %arg2[%c0_1, %c0_2] : memref<64x32xf32, #tpu.memory_space<vmem>>, vector<64x32xf32>
    %cst = arith.constant dense<0.000000e+00> : vector<32x32xf32>
    %2 = tpu.matmul %0, %1, %cst {dimension_numbers = #tpu.dot_dimension_numbers<[1], [0], [0], [1], [0, 0, 1, 1], [], []>} : vector<32x64xf32>, vector<64x32xf32>, vector<32x32xf32> -> vector<32x32xf32>
    %c0_3 = arith.constant 0 : index
    %c0_4 = arith.constant 0 : index
    %3 = vector.load %arg3[%c0_3, %c0_4] : memref<1x32xf32, #tpu.memory_space<vmem>>, vector<1x32xf32>
    %4 = vector.broadcast %3 : vector<1x32xf32> to vector<32x32xf32>
    %5 = arith.addf %2, %4 : vector<32x32xf32>
    %cst_5 = arith.constant 0.000000e+00 : f32
    %6 = vector.broadcast %cst_5 : f32 to vector<32x32xf32>
    %7 = arith.maximumf %5, %6 : vector<32x32xf32>
    %c0_6 = arith.constant 0 : index
    %c0_7 = arith.constant 0 : index
    %8 = vector.load %arg4[%c0_6, %c0_7] : memref<32x32xf32, #tpu.memory_space<vmem>>, vector<32x32xf32>
    %cst_8 = arith.constant dense<0.000000e+00> : vector<32x32xf32>
    %9 = tpu.matmul %7, %8, %cst_8 {dimension_numbers = #tpu.dot_dimension_numbers<[1], [0], [0], [1], [0, 0, 1, 1], [], []>} : vector<32x32xf32>, vector<32x32xf32>, vector<32x32xf32> -> vector<32x32xf32>
    %c0_9 = arith.constant 0 : index
    %c0_10 = arith.constant 0 : index
    %10 = vector.load %arg5[%c0_9, %c0_10] : memref<1x32xf32, #tpu.memory_space<vmem>>, vector<1x32xf32>
    %11 = vector.broadcast %10 : vector<1x32xf32> to vector<32x32xf32>
    %12 = arith.addf %9, %11 : vector<32x32xf32>
    %cst_11 = arith.constant dense<0.000000e+00> : vector<32xf32>
    %13 = vector.multi_reduction <add>, %12, %cst_11 [1] : vector<32x32xf32> to vector<32xf32>
    %14 = vector.shape_cast %13 : vector<32xf32> to vector<32x1xf32>
    %cst_12 = arith.constant 3.200000e+01 : f32
    %15 = vector.broadcast %cst_12 : f32 to vector<32x1xf32>
    %16 = arith.divf %14, %15 : vector<32x1xf32>
    %17 = vector.broadcast %16 : vector<32x1xf32> to vector<32x32xf32>
    %18 = arith.subf %12, %17 : vector<32x32xf32>
    %19 = arith.mulf %18, %18 : vector<32x32xf32>
    %cst_13 = arith.constant dense<0.000000e+00> : vector<32xf32>
    %20 = vector.multi_reduction <add>, %19, %cst_13 [1] : vector<32x32xf32> to vector<32xf32>
    %21 = vector.shape_cast %20 : vector<32xf32> to vector<32x1xf32>
    %cst_14 = arith.constant 3.200000e+01 : f32
    %22 = vector.broadcast %cst_14 : f32 to vector<32x1xf32>
    %23 = arith.divf %21, %22 : vector<32x1xf32>
    %24 = vector.broadcast %16 : vector<32x1xf32> to vector<32x32xf32>
    %25 = arith.subf %12, %24 : vector<32x32xf32>
    %cst_15 = arith.constant 9.99999974E-6 : f32
    %26 = vector.broadcast %cst_15 : f32 to vector<32x1xf32>
    %27 = arith.addf %23, %26 : vector<32x1xf32>
    %28 = math.rsqrt %27 : vector<32x1xf32>
    %29 = vector.broadcast %28 : vector<32x1xf32> to vector<32x32xf32>
    %30 = arith.mulf %25, %29 : vector<32x32xf32>
    %c0_16 = arith.constant 0 : index
    %c0_17 = arith.constant 0 : index
    %31 = vector.load %arg6[%c0_16, %c0_17] : memref<1x32xf32, #tpu.memory_space<vmem>>, vector<1x32xf32>
    %32 = vector.broadcast %31 : vector<1x32xf32> to vector<32x32xf32>
    %33 = arith.mulf %30, %32 : vector<32x32xf32>
    %c0_18 = arith.constant 0 : index
    %c0_19 = arith.constant 0 : index
    %34 = vector.load %arg7[%c0_18, %c0_19] : memref<1x32xf32, #tpu.memory_space<vmem>>, vector<1x32xf32>
    %35 = vector.broadcast %34 : vector<1x32xf32> to vector<32x32xf32>
    %36 = arith.addf %33, %35 : vector<32x32xf32>
    %c0_20 = arith.constant 0 : index
    %c0_21 = arith.constant 0 : index
    %37 = vector.load %arg8[%c0_20, %c0_21] : memref<32x32xf32, #tpu.memory_space<vmem>>, vector<32x32xf32>
    tpu.vector_store %arg8[%c0_20, %c0_21], %36 {strides = array<i32>} : memref<32x32xf32, #tpu.memory_space<vmem>>, vector<32x32xf32>,
    return
  }
  func.func @transform_0(%arg0: i32) -> (i32, i32) {
    %c0_i32 = arith.constant 0 : i32
    %c0_i32_0 = arith.constant 0 : i32
    return %arg0, %c0_i32 : i32, i32
  }
  func.func @transform_1(%arg0: i32) -> (i32, i32) {
    %c0_i32 = arith.constant 0 : i32
    %c0_i32_0 = arith.constant 0 : i32
    %c0_i32_1 = arith.constant 0 : i32
    return %c0_i32, %c0_i32_0 : i32, i32
  }
  func.func @transform_2(%arg0: i32) -> (i32, i32) {
    %c0_i32 = arith.constant 0 : i32
    %c0_i32_0 = arith.constant 0 : i32
    %c0_i32_1 = arith.constant 0 : i32
    return %c0_i32, %c0_i32_0 : i32, i32
  }
  func.func @transform_3(%arg0: i32) -> (i32, i32) {
    %c0_i32 = arith.constant 0 : i32
    %c0_i32_0 = arith.constant 0 : i32
    %c0_i32_1 = arith.constant 0 : i32
    return %c0_i32, %c0_i32_0 : i32, i32
  }
  func.func @transform_4(%arg0: i32) -> (i32, i32) {
    %c0_i32 = arith.constant 0 : i32
    %c0_i32_0 = arith.constant 0 : i32
    %c0_i32_1 = arith.constant 0 : i32
    return %c0_i32, %c0_i32_0 : i32, i32
  }
  func.func @transform_5(%arg0: i32) -> (i32, i32) {
    %c0_i32 = arith.constant 0 : i32
    %c0_i32_0 = arith.constant 0 : i32
    %c0_i32_1 = arith.constant 0 : i32
    return %c0_i32, %c0_i32_0 : i32, i32
  }
  func.func @transform_6(%arg0: i32) -> (i32, i32) {
    %c0_i32 = arith.constant 0 : i32
    %c0_i32_0 = arith.constant 0 : i32
    %c0_i32_1 = arith.constant 0 : i32
    return %c0_i32, %c0_i32_0 : i32, i32
  }
  func.func @transform_7(%arg0: i32) -> (i32, i32) {
    %c0_i32 = arith.constant 0 : i32
    %c0_i32_0 = arith.constant 0 : i32
    return %arg0, %c0_i32 : i32, i32
  }
}

</mosaic_0001>

<llo_original>
// kernel: tpu_custom_call.1
$region0: #{tpu_custom_call.1}
  #allocation0 [shape = 'u32[]', space=smem, size = 0x4, offset = 0x4, fixed_abs, tag = 'smem constant byte address 0x4 - core index']
  #allocation1 [shape = 'u32[144,128]{1,0:T(1,128)}', space=vmem, size = 0x12000, scoped, tag = 'internal scratch']
  %s0 = inlined_call_operand.vmem [shape: f32[64,64], index: 0, kind: input, shape index: {}]
  %s1 = inlined_call_operand.vmem [shape: f32[64,32], index: 1, kind: input, shape index: {}]
  %s2 = inlined_call_operand.vmem [shape: f32[1,32], index: 2, kind: input, shape index: {}]
  %s3 = inlined_call_operand.vmem [shape: f32[32,32], index: 3, kind: input, shape index: {}]
  %s4 = inlined_call_operand.vmem [shape: f32[1,32], index: 4, kind: input, shape index: {}]
  %s5 = inlined_call_operand.vmem [shape: f32[1,32], index: 5, kind: input, shape index: {}]
  %s6 = inlined_call_operand.vmem [shape: f32[1,32], index: 6, kind: input, shape index: {}]
  %s7 = inlined_call_operand.vmem [shape: f32[64,32], index: 7, kind: output, shape index: {}]
  %s8 = sld [smem:[#allocation0]]
  $region61: #{tpu_custom_call.1} parent=0
    _
  %s10 = ssub.s32 1, %s8
  %s11 = scalar_select 0, %s10, %s8
  loop: start=0, step=1, limit=4
  $region2: #{tpu_custom_call.1} parent=0 // loop_pre_header
    _
  $region3: #{tpu_custom_call.1} parent=0 // loop_header
    %s13 = sphi 0, %s17
    %p14 = scmp.ge.s32.totalorder %s13, 4
    %s23 = sphi 0, %s25
    %s26 = sphi 0, %s23
    %s27 = sphi 0, %s26
    %s43 = sphi 0, %s27
    %s47 = sphi 0, %s47
    %s49 = sphi 0, %s47
    %s50 = sphi 0, %s49
    %s64 = sphi 0, %s50
    %s68 = sphi 0, %s68
    %s70 = sphi 0, %s68
    %s71 = sphi 0, %s70
    %s85 = sphi 0, %s71
    %s89 = sphi 0, %s89
    %s91 = sphi 0, %s89
    %s92 = sphi 0, %s91
    %s106 = sphi 0, %s92
    %s110 = sphi 0, %s110
    %s112 = sphi 0, %s110
    %s113 = sphi 0, %s112
    %s127 = sphi 0, %s113
    %s131 = sphi 0, %s131
    %s133 = sphi 0, %s131
    %s134 = sphi 0, %s133
    %s148 = sphi 0, %s134
    %s152 = sphi 0, %s152
    %s154 = sphi 0, %s152
    %s155 = sphi 0, %s154
    %s169 = sphi 0, %s155
    %s175 = sphi 0, %s177
    %s178 = sphi 0, %s175
    %s179 = sphi 0, %s178
    %s195 = sphi 0, %s179
  $region4: #{tpu_custom_call.1} parent=0 // loop_header_branch
    %16 = sbr.rel (%p14) target = $region8
  $region5: #{tpu_custom_call.1} parent=0 // loop_body
    %s18 = ssub.s32 %s13, 1
    %s19 = ssub.s32 %s13, 2
    %s20 = sadd.s32 %s13, 1
    %s21 = ssub.s32 %s13, %s20
    %p22 = scmp.eq.s32.totalorder %s21, 0
    %s24 = sadd.s32 %s23, 1
    %s25 = scalar_select %p22, %s23, %s24
    %p28 = pneg %p22
    %p29 = scmp.eq.s32.totalorder %s13, 1
    %p30 = por %p28, %p29
    %p31 = scmp.ne.s32.totalorder %s23, %s26
    %p32 = scmp.eq.s32.totalorder %s13, 0
    %p33 = por %p31, %p32
    %p34 = scmp.ne.s32.totalorder %s23, %s26
    %p35 = scmp.eq.s32.totalorder %s18, 1
    %p36 = por %p34, %p35
    %p37 = scmp.ne.s32.totalorder %s26, %s27
    %p38 = scmp.eq.s32.totalorder %s18, 0
    %p39 = por %p37, %p38
    %p40 = scmp.ne.s32.totalorder %s26, %s27
    %p41 = scmp.eq.s32.totalorder %s19, 1
    %p42 = por %p40, %p41
    %p44 = scmp.ne.s32.totalorder %s27, %s43
    %p45 = scmp.eq.s32.totalorder %s19, 0
    %p46 = por %p44, %p45
    %s48 = sadd.s32 %s47, 1
    %p51 = scmp.eq.s32.totalorder %s13, 1
    %p52 = scmp.ne.s32.totalorder %s47, %s49
    %p53 = scmp.eq.s32.totalorder %s13, 0
    %p54 = por %p52, %p53
    %p55 = scmp.ne.s32.totalorder %s47, %s49
    %p56 = scmp.eq.s32.totalorder %s18, 1
    %p57 = por %p55, %p56
    %p58 = scmp.ne.s32.totalorder %s49, %s50
    %p59 = scmp.eq.s32.totalorder %s18, 0
    %p60 = por %p58, %p59
    %p61 = scmp.ne.s32.totalorder %s49, %s50
    %p62 = scmp.eq.s32.totalorder %s19, 1
    %p63 = por %p61, %p62
    %p65 = scmp.ne.s32.totalorder %s50, %s64
    %p66 = scmp.eq.s32.totalorder %s19, 0
    %p67 = por %p65, %p66
    %s69 = sadd.s32 %s68, 1
    %p72 = scmp.eq.s32.totalorder %s13, 1
    %p73 = scmp.ne.s32.totalorder %s68, %s70
    %p74 = scmp.eq.s32.totalorder %s13, 0
    %p75 = por %p73, %p74
    %p76 = scmp.ne.s32.totalorder %s68, %s70
    %p77 = scmp.eq.s32.totalorder %s18, 1
    %p78 = por %p76, %p77
    %p79 = scmp.ne.s32.totalorder %s70, %s71
    %p80 = scmp.eq.s32.totalorder %s18, 0
    %p81 = por %p79, %p80
    %p82 = scmp.ne.s32.totalorder %s70, %s71
    %p83 = scmp.eq.s32.totalorder %s19, 1
    %p84 = por %p82, %p83
    %p86 = scmp.ne.s32.totalorder %s71, %s85
    %p87 = scmp.eq.s32.totalorder %s19, 0
    %p88 = por %p86, %p87
    %s90 = sadd.s32 %s89, 1
    %p93 = scmp.eq.s32.totalorder %s13, 1
    %p94 = scmp.ne.s32.totalorder %s89, %s91
    %p95 = scmp.eq.s32.totalorder %s13, 0
    %p96 = por %p94, %p95
    %p97 = scmp.ne.s32.totalorder %s89, %s91
    %p98 = scmp.eq.s32.totalorder %s18, 1
    %p99 = por %p97, %p98
    %p100 = scmp.ne.s32.totalorder %s91, %s92
    %p101 = scmp.eq.s32.totalorder %s18, 0
    %p102 = por %p100, %p101
    %p103 = scmp.ne.s32.totalorder %s91, %s92
    %p104 = scmp.eq.s32.totalorder %s19, 1
    %p105 = por %p103, %p104
    %p107 = scmp.ne.s32.totalorder %s92, %s106
    %p108 = scmp.eq.s32.totalorder %s19, 0
    %p109 = por %p107, %p108
    %s111 = sadd.s32 %s110, 1
    %p114 = scmp.eq.s32.totalorder %s13, 1
    %p115 = scmp.ne.s32.totalorder %s110, %s112
    %p116 = scmp.eq.s32.totalorder %s13, 0
    %p117 = por %p115, %p116
    %p118 = scmp.ne.s32.totalorder %s110, %s112
    %p119 = scmp.eq.s32.totalorder %s18, 1
    %p120 = por %p118, %p119
    %p121 = scmp.ne.s32.totalorder %s112, %s113
    %p122 = scmp.eq.s32.totalorder %s18, 0
    %p123 = por %p121, %p122
    %p124 = scmp.ne.s32.totalorder %s112, %s113
    %p125 = scmp.eq.s32.totalorder %s19, 1
    %p126 = por %p124, %p125
    %p128 = scmp.ne.s32.totalorder %s113, %s127
    %p129 = scmp.eq.s32.totalorder %s19, 0
    %p130 = por %p128, %p129
    %s132 = sadd.s32 %s131, 1
    %p135 = scmp.eq.s32.totalorder %s13, 1
    %p136 = scmp.ne.s32.totalorder %s131, %s133
    %p137 = scmp.eq.s32.totalorder %s13, 0
    %p138 = por %p136, %p137
    %p139 = scmp.ne.s32.totalorder %s131, %s133
    %p140 = scmp.eq.s32.totalorder %s18, 1
    %p141 = por %p139, %p140
    %p142 = scmp.ne.s32.totalorder %s133, %s134
    %p143 = scmp.eq.s32.totalorder %s18, 0
    %p144 = por %p142, %p143
    %p145 = scmp.ne.s32.totalorder %s133, %s134
    %p146 = scmp.eq.s32.totalorder %s19, 1
    %p147 = por %p145, %p146
    %p149 = scmp.ne.s32.totalorder %s134, %s148
    %p150 = scmp.eq.s32.totalorder %s19, 0
    %p151 = por %p149, %p150
    %s153 = sadd.s32 %s152, 1
    %p156 = scmp.eq.s32.totalorder %s13, 1
    %p157 = scmp.ne.s32.totalorder %s152, %s154
    %p158 = scmp.eq.s32.totalorder %s13, 0
    %p159 = por %p157, %p158
    %p160 = scmp.ne.s32.totalorder %s152, %s154
    %p161 = scmp.eq.s32.totalorder %s18, 1
    %p162 = por %p160, %p161
    %p163 = scmp.ne.s32.totalorder %s154, %s155
    %p164 = scmp.eq.s32.totalorder %s18, 0
    %p165 = por %p163, %p164
    %p166 = scmp.ne.s32.totalorder %s154, %s155
    %p167 = scmp.eq.s32.totalorder %s19, 1
    %p168 = por %p166, %p167
    %p170 = scmp.ne.s32.totalorder %s155, %s169
    %p171 = scmp.eq.s32.totalorder %s19, 0
    %p172 = por %p170, %p171
    %s173 = ssub.s32 %s13, %s20
    %p174 = scmp.eq.s32.totalorder %s173, 0
    %s176 = sadd.s32 %s175, 1
    %s177 = scalar_select %p174, %s175, %s176
    %p180 = pneg %p174
    %p181 = scmp.eq.s32.totalorder %s13, 1
    %p182 = por %p180, %p181
    %p183 = scmp.ne.s32.totalorder %s175, %s178
    %p184 = scmp.eq.s32.totalorder %s13, 0
    %p185 = por %p183, %p184
    %p186 = scmp.ne.s32.totalorder %s175, %s178
    %p187 = scmp.eq.s32.totalorder %s18, 1
    %p188 = por %p186, %p187
    %p189 = scmp.ne.s32.totalorder %s178, %s179
    %p190 = scmp.eq.s32.totalorder %s18, 0
    %p191 = por %p189, %p190
    %p192 = scmp.ne.s32.totalorder %s178, %s179
    %p193 = scmp.eq.s32.totalorder %s19, 1
    %p194 = por %p192, %p193
    %p196 = scmp.ne.s32.totalorder %s179, %s195
    %p197 = scmp.eq.s32.totalorder %s19, 0
    %p198 = por %p196, %p197
    %p199 = scmp.le.s32.totalorder 1, %s13
    %p200 = scmp.lt.s32.totalorder %s13, 3
    %p201 = pnand %p199, %p200
    %p202 = pneg %p201
    // Predicated region
    $region9: #{tpu_custom_call.1} parent=5 // pred_check
      _
    $region10: #{tpu_custom_call.1} parent=5 // pred_check_branch
      %204 = sbr.rel (%p201) target = $region12
    $region11: #{tpu_custom_call.1} parent=5 // pred_region
      %s205 = ssub.s32 %s13, 1
      // Predicated region
      $region13: #{tpu_custom_call.1} parent=11 // pred_check
        %p206 = pneg %p60
      $region14: #{tpu_custom_call.1} parent=11 // pred_check_branch
        %208 = sbr.rel (%p206) target = $region16
      $region15: #{tpu_custom_call.1} parent=11 // pred_region
        _
      $region16: #{tpu_custom_call.1} parent=11 // pred_fallthru
        _
      // Predicated region
      $region17: #{tpu_custom_call.1} parent=11 // pred_check
        %p209 = pneg %p81
      $region18: #{tpu_custom_call.1} parent=11 // pred_check_branch
        %211 = sbr.rel (%p209) target = $region20
      $region19: #{tpu_custom_call.1} parent=11 // pred_region
        _
      $region20: #{tpu_custom_call.1} parent=11 // pred_fallthru
        _
      // Predicated region
      $region21: #{tpu_custom_call.1} parent=11 // pred_check
        %p212 = pneg %p102
      $region22: #{tpu_custom_call.1} parent=11 // pred_check_branch
        %214 = sbr.rel (%p212) target = $region24
      $region23: #{tpu_custom_call.1} parent=11 // pred_region
        _
      $region24: #{tpu_custom_call.1} parent=11 // pred_fallthru
        _
      // Predicated region
      $region25: #{tpu_custom_call.1} parent=11 // pred_check
        %p215 = pneg %p123
      $region26: #{tpu_custom_call.1} parent=11 // pred_check_branch
        %217 = sbr.rel (%p215) target = $region28
      $region27: #{tpu_custom_call.1} parent=11 // pred_region
        _
      $region28: #{tpu_custom_call.1} parent=11 // pred_fallthru
        _
      // Predicated region
      $region29: #{tpu_custom_call.1} parent=11 // pred_check
        %p218 = pneg %p144
      $region30: #{tpu_custom_call.1} parent=11 // pred_check_branch
        %220 = sbr.rel (%p218) target = $region32
      $region31: #{tpu_custom_call.1} parent=11 // pred_region
        _
      $region32: #{tpu_custom_call.1} parent=11 // pred_fallthru
        _
      // Predicated region
      $region33: #{tpu_custom_call.1} parent=11 // pred_check
        %p221 = pneg %p165
      $region34: #{tpu_custom_call.1} parent=11 // pred_check_branch
        %223 = sbr.rel (%p221) target = $region36
      $region35: #{tpu_custom_call.1} parent=11 // pred_region
        _
      $region36: #{tpu_custom_call.1} parent=11 // pred_fallthru
        _
    $region12: #{tpu_custom_call.1} parent=5 // pred_fallthru
      _
    %p224 = scmp.lt.s32.totalorder %s13, 2
    // Predicated region
    $region37: #{tpu_custom_call.1} parent=5 // pred_check
      %p225 = pneg %p224
    $region38: #{tpu_custom_call.1} parent=5 // pred_check_branch
      %227 = sbr.rel (%p225) target = $region40
    $region39: #{tpu_custom_call.1} parent=5 // pred_region
      // Predicated region
      $region41: #{tpu_custom_call.1} parent=39 // pred_check
        %p228 = pneg %p33
      $region42: #{tpu_custom_call.1} parent=39 // pred_check_branch
        %230 = sbr.rel (%p228) target = $region44
      $region43: #{tpu_custom_call.1} parent=39 // pred_region
        %s231 = smul.u32 4, %s13
        %p232 = scmp.lt.s32.totalorder %s231, 7
        %s233 = scalar_select %p232, %s231, 7
        %s234 = smul.addr %s233, 8
        %s235 = scalar_lea.vmem %s0, %s234
        %s236 = smul.u32 4, %s13
      $region44: #{tpu_custom_call.1} parent=39 // pred_fallthru
        _
    $region40: #{tpu_custom_call.1} parent=5 // pred_fallthru
      _
    %p237 = scmp.le.s32.totalorder 1, %s13
    %p238 = scmp.lt.s32.totalorder %s13, 3
    %p239 = pnand %p237, %p238
    %p240 = pneg %p239
    // Predicated region
    $region45: #{tpu_custom_call.1} parent=5 // pred_check
      _
    $region46: #{tpu_custom_call.1} parent=5 // pred_check_branch
      %242 = sbr.rel (%p239) target = $region48
    $region47: #{tpu_custom_call.1} parent=5 // pred_region
      %s243 = ssub.s32 %s13, 1
      %s244 = smul.u32 4, %s18
      %p245 = scmp.lt.s32.totalorder %s244, 7
      %s246 = scalar_select %p245, %s244, 7
      %s247 = smul.addr %s246, 8
      %s248 = scalar_lea.vmem %s0, %s247
      %p249 = pneg %p39
      %p250 = pneg %p36
      %p251 = pneg %p60
      %p252 = pneg %p57
      %p253 = pneg %p81
      %p254 = pneg %p78
      %p255 = pneg %p102
      %p256 = pneg %p99
      %p257 = pneg %p123
      %p258 = pneg %p120
      %p259 = pneg %p144
      %p260 = pneg %p141
      %p261 = pneg %p165
      %p262 = pneg %p162
      %p263 = pneg %p191
      %p264 = pneg %p188
      %s265 = smul.u32 4, %s18
      %p266 = scmp.lt.s32.totalorder %s265, 7
      %s267 = scalar_select %p266, %s265, 7
      %s268 = smul.addr %s267, 8
      %s269 = scalar_lea.vmem %s7, %s268
      %s270 = smul.u32 4, %s18
      %p271 = scmp.lt.s32.totalorder %s270, 7
      %s272 = scalar_select %p271, %s270, 7
      %s273 = smul.addr %s272, 8
      %s274 = scalar_lea.vmem %s0, %s273
      %s275 = smul.u32 4, %s18
      %s276 = smul.u32 4, %s18
      %p277 = scmp.lt.s32.totalorder %s276, 7
      %s278 = scalar_select %p277, %s276, 7
      %s279 = smul.addr %s278, 8
      %s280 = scalar_lea.vmem %s7, %s279
      %s281 = smul.u32 4, %s18
      %v282 = vld [vmem:[%s274] sm:$0xff]
      %v283 = vld [vmem:[%s274 + $0x8] sm:$0xff]
      %v284 = vld [vmem:[%s274 + $0x10] sm:$0xff]
      %v285 = vld [vmem:[%s274 + $0x18] sm:$0xff]
      %v286 = vld [vmem:[%s1] sm:$0xff]
      %v287 = vld [vmem:[%s1 + $0x8] sm:$0xff]
      %v288 = vld [vmem:[%s1 + $0x10] sm:$0xff]
      %v289 = vld [vmem:[%s1 + $0x18] sm:$0xff]
      %v290 = vld [vmem:[%s1 + $0x20] sm:$0xff]
      %v291 = vld [vmem:[%s1 + $0x28] sm:$0xff]
      %v292 = vld [vmem:[%s1 + $0x30] sm:$0xff]
      %v293 = vld [vmem:[%s1 + $0x38] sm:$0xff]
      %v294 = vld [vmem:[%s2] sm:$0x1]
      %v296 = vlaneseq
      %v297 = vshrl.u32 %v296, 7
      %v298 = vsub.s32 0, %v297
      %v299 = vrot.slane %v294, %v298
      %vm301 = vcmask 523264
      %v303 = vsel %vm301, %v282, 0
      %v306 = vsel %vm301, %v283, 0
      %v309 = vsel %vm301, %v284, 0
      %v312 = vsel %vm301, %v285, 0
      %314 = vmatprep.subr.mxu0 0.0
      %315 = vmatpush1.msra.mxu0 %v286
      %316 = vmatprep.subr.mxu0 0.0
      %317 = vmatpush1.msra.mxu0 %v287
      %318 = vmatprep.subr.mxu0 0.0
      %319 = vmatpush1.msra.mxu0 %v288
      %320 = vmatprep.subr.mxu0 0.0
      %321 = vmatpush1.msra.mxu0 %v289
      %322 = vmatprep.subr.mxu0 0.0
      %323 = vmatpush1.msra.mxu0 %v290
      %324 = vmatprep.subr.mxu0 0.0
      %325 = vmatpush1.msra.mxu0 %v291
      %326 = vmatprep.subr.mxu0 0.0
      %327 = vmatpush1.msra.mxu0 %v292
      %328 = vmatprep.subr.mxu0 0.0
      %329 = vmatpush1.msra.mxu0 %v293
      %330 = vmatprep.subr.mxu0 0.0
      %331 = vmatpush1.msra.mxu0 0.0
      %332 = vmatprep.subr.mxu0 0.0
      %333 = vmatpush1.msra.mxu0 0.0
      %334 = vmatprep.subr.mxu0 0.0
      %335 = vmatpush1.msra.mxu0 0.0
      %336 = vmatprep.subr.mxu0 0.0
      %337 = vmatpush1.msra.mxu0 0.0
      %338 = vmatprep.subr.mxu0 0.0
      %339 = vmatpush1.msra.mxu0 0.0
      %340 = vmatprep.subr.mxu0 0.0
      %341 = vmatpush1.msra.mxu0 0.0
      %342 = vmatprep.subr.mxu0 0.0
      %343 = vmatpush1.msra.mxu0 0.0
      %344 = vmatprep.subr.mxu0 0.0
      %345 = vmatpush1.msra.mxu0 0.0
      %346 = vmatprep.subr.mxu0 0.0
      %347 = vmatpush1.msra.mxu0 0.0
      %348 = vmatprep.subr.mxu0 0.0
      %349 = vmatpush1.msra.mxu0 0.0
      %350 = vmatprep.subr.mxu0 0.0
      %351 = vmatpush1.msra.mxu0 0.0
      %352 = vmatprep.subr.mxu0 0.0
      %353 = vmatpush1.msra.mxu0 0.0
      %354 = vmatprep.subr.mxu0 0.0
      %355 = vmatpush1.msra.mxu0 0.0
      %356 = vmatprep.subr.mxu0 0.0
      %357 = vmatpush1.msra.mxu0 0.0
      %358 = vmatprep.subr.mxu0 0.0
      %359 = vmatpush1.msra.mxu0 0.0
      %360 = vmatprep.subr.mxu0 0.0
      %361 = vmatpush1.msra.mxu0 0.0
      %362 = vmatprep.subr.mxu0 0.0
      %363 = vmatpush1.msra.mxu0 0.0
      %364 = vmatprep.subr.mxu0 0.0
      %365 = vmatpush1.msra.mxu0 0.0
      %366 = vmatprep.subr.mxu0 0.0
      %367 = vmatpush1.msra.mxu0 0.0
      %368 = vmatprep.subr.mxu0 0.0
      %369 = vmatpush1.msra.mxu0 0.0
      %370 = vmatprep.subr.mxu0 0.0
      %371 = vmatpush1.msra.mxu0 0.0
      %372 = vmatprep.subr.mxu0 0.0
      %373 = vmatpush1.msra.mxu0 0.0
      %374 = vmatprep.subr.mxu0 0.0
      %375 = vmatpush1.msra.mxu0 0.0
      %376 = vmatprep.subr.mxu0 0.0
      %377 = vmatpush1.msra.mxu0 0.0
      %378 = vmatprep.mubr.f32.mxu0 0.0
      %379 = vmatmul.mubr.f32.gmra.mrb[0].mxu0 %v303
      %v380 = vpop.f32.mrb[0].mxu0
      %v381 = vadd.f32 %v299, %v380
      %v382 = vpop.f32.mrb[0].mxu0
      %383 = vmatprep.mubr.f32.mxu0 0.0
      %384 = vmatmul.mubr.f32.gmra.mrb[0].mxu0 %v306
      %v385 = vpop.f32.mrb[0].mxu0
      %v386 = vadd.f32 %v299, %v385
      %v387 = vpop.f32.mrb[0].mxu0
      %388 = vmatprep.mubr.f32.mxu0 0.0
      %389 = vmatmul.mubr.f32.gmra.mrb[0].mxu0 %v309
      %v390 = vpop.f32.mrb[0].mxu0
      %v391 = vadd.f32 %v299, %v390
      %v392 = vpop.f32.mrb[0].mxu0
      %393 = vmatprep.mubr.f32.mxu0 0.0
      %394 = vmatmul.mubr.f32.gmra.mrb[0].mxu0 %v312
      %v395 = vpop.f32.mrb[0].mxu0
      %v396 = vadd.f32 %v299, %v395
      %v397 = vpop.f32.mrb[0].mxu0
      %398 = vdwg.mxu0
      %v399 = vmax.f32 %v381, 0.0
      %v400 = vmax.f32 %v386, 0.0
      %v401 = vmax.f32 %v391, 0.0
      %v402 = vmax.f32 %v396, 0.0
      %v403 = vld [vmem:[%s3] sm:$0xff]
      %v404 = vld [vmem:[%s3 + $0x8] sm:$0xff]
      %v405 = vld [vmem:[%s3 + $0x10] sm:$0xff]
      %v406 = vld [vmem:[%s3 + $0x18] sm:$0xff]
      %v407 = vld [vmem:[%s4] sm:$0x1]
      %v409 = vlaneseq
      %v410 = vshrl.u32 %v409, 7
      %v411 = vsub.s32 0, %v410
      %v412 = vrot.slane %v407, %v411
      %vm414 = vcmask 261120
      %v416 = vsel %vm414, %v399, 0
      %v419 = vsel %vm414, %v400, 0
      %v422 = vsel %vm414, %v401, 0
      %v425 = vsel %vm414, %v402, 0
      %427 = vmatprep.subr.mxu0 0.0
      %428 = vmatpush1.msra.mxu0 %v403
      %429 = vmatprep.subr.mxu0 0.0
      %430 = vmatpush1.msra.mxu0 %v404
      %431 = vmatprep.subr.mxu0 0.0
      %432 = vmatpush1.msra.mxu0 %v405
      %433 = vmatprep.subr.mxu0 0.0
      %434 = vmatpush1.msra.mxu0 %v406
      %435 = vmatprep.subr.mxu0 0.0
      %436 = vmatpush1.msra.mxu0 0.0
      %437 = vmatprep.subr.mxu0 0.0
      %438 = vmatpush1.msra.mxu0 0.0
      %439 = vmatprep.subr.mxu0 0.0
      %440 = vmatpush1.msra.mxu0 0.0
      %441 = vmatprep.subr.mxu0 0.0
      %442 = vmatpush1.msra.mxu0 0.0
      %443 = vmatprep.subr.mxu0 0.0
      %444 = vmatpush1.msra.mxu0 0.0
      %445 = vmatprep.subr.mxu0 0.0
      %446 = vmatpush1.msra.mxu0 0.0
      %447 = vmatprep.subr.mxu0 0.0
      %448 = vmatpush1.msra.mxu0 0.0
      %449 = vmatprep.subr.mxu0 0.0
      %450 = vmatpush1.msra.mxu0 0.0
      %451 = vmatprep.subr.mxu0 0.0
      %452 = vmatpush1.msra.mxu0 0.0
      %453 = vmatprep.subr.mxu0 0.0
      %454 = vmatpush1.msra.mxu0 0.0
      %455 = vmatprep.subr.mxu0 0.0
      %456 = vmatpush1.msra.mxu0 0.0
      %457 = vmatprep.subr.mxu0 0.0
      %458 = vmatpush1.msra.mxu0 0.0
      %459 = vmatprep.subr.mxu0 0.0
      %460 = vmatpush1.msra.mxu0 0.0
      %461 = vmatprep.subr.mxu0 0.0
      %462 = vmatpush1.msra.mxu0 0.0
      %463 = vmatprep.subr.mxu0 0.0
      %464 = vmatpush1.msra.mxu0 0.0
      %465 = vmatprep.subr.mxu0 0.0
      %466 = vmatpush1.msra.mxu0 0.0
      %467 = vmatprep.subr.mxu0 0.0
      %468 = vmatpush1.msra.mxu0 0.0
      %469 = vmatprep.subr.mxu0 0.0
      %470 = vmatpush1.msra.mxu0 0.0
      %471 = vmatprep.subr.mxu0 0.0
      %472 = vmatpush1.msra.mxu0 0.0
      %473 = vmatprep.subr.mxu0 0.0
      %474 = vmatpush1.msra.mxu0 0.0
      %475 = vmatprep.subr.mxu0 0.0
      %476 = vmatpush1.msra.mxu0 0.0
      %477 = vmatprep.subr.mxu0 0.0
      %478 = vmatpush1.msra.mxu0 0.0
      %479 = vmatprep.subr.mxu0 0.0
      %480 = vmatpush1.msra.mxu0 0.0
      %481 = vmatprep.subr.mxu0 0.0
      %482 = vmatpush1.msra.mxu0 0.0
      %483 = vmatprep.subr.mxu0 0.0
      %484 = vmatpush1.msra.mxu0 0.0
      %485 = vmatprep.subr.mxu0 0.0
      %486 = vmatpush1.msra.mxu0 0.0
      %487 = vmatprep.subr.mxu0 0.0
      %488 = vmatpush1.msra.mxu0 0.0
      %489 = vmatprep.subr.mxu0 0.0
      %490 = vmatpush1.msra.mxu0 0.0
      %491 = vmatprep.mubr.f32.mxu0 0.0
      %492 = vmatmul.mubr.f32.gmra.mrb[0].mxu0 %v416
      %v493 = vpop.f32.mrb[0].mxu0
      %v494 = vadd.f32 %v412, %v493
      %v495 = vpop.f32.mrb[0].mxu0
      %496 = vmatprep.mubr.f32.mxu0 0.0
      %497 = vmatmul.mubr.f32.gmra.mrb[0].mxu0 %v419
      %v498 = vpop.f32.mrb[0].mxu0
      %v499 = vadd.f32 %v412, %v498
      %v500 = vpop.f32.mrb[0].mxu0
      %501 = vmatprep.mubr.f32.mxu0 0.0
      %502 = vmatmul.mubr.f32.gmra.mrb[0].mxu0 %v422
      %v503 = vpop.f32.mrb[0].mxu0
      %v504 = vadd.f32 %v412, %v503
      %v505 = vpop.f32.mrb[0].mxu0
      %506 = vmatprep.mubr.f32.mxu0 0.0
      %507 = vmatmul.mubr.f32.gmra.mrb[0].mxu0 %v425
      %v508 = vpop.f32.mrb[0].mxu0
      %v509 = vadd.f32 %v412, %v508
      %v510 = vpop.f32.mrb[0].mxu0
      %511 = vdwg.mxu0
      %v512 = vsel %vm414, %v494, 0.0
      %513 = vadd.xlane.f32.xlu0 %v512
      %v514 = vpop.xlane.xlu0 %513
      %v515 = vsel %vm414, %v499, 0.0
      %516 = vadd.xlane.f32.xlu0 %v515
      %v517 = vpop.xlane.xlu0 %516
      %v518 = vsel %vm414, %v504, 0.0
      %519 = vadd.xlane.f32.xlu0 %v518
      %v520 = vpop.xlane.xlu0 %519
      %v521 = vsel %vm414, %v509, 0.0
      %522 = vadd.xlane.f32.xlu0 %v521
      %v523 = vpop.xlane.xlu0 %522
      %v524 = vrcp.pop 32.0
      %v525 = vmul.f32 %v514, %v524
      %v526 = vmul.f32 %v517, %v524
      %v527 = vmul.f32 %v520, %v524
      %v528 = vmul.f32 %v523, %v524
      %v529 = vsub.f32 %v494, %v525
      %v530 = vsub.f32 %v499, %v526
      %v531 = vsub.f32 %v504, %v527
      %v532 = vsub.f32 %v509, %v528
      %v533 = vmul.f32 %v529, %v529
      %v534 = vmul.f32 %v530, %v530
      %v535 = vmul.f32 %v531, %v531
      %v536 = vmul.f32 %v532, %v532
      %v537 = vsel %vm414, %v533, 0.0
      %538 = vadd.xlane.f32.xlu0 %v537
      %v539 = vpop.xlane.xlu0 %538
      %v540 = vsel %vm414, %v534, 0.0
      %541 = vadd.xlane.f32.xlu0 %v540
      %v542 = vpop.xlane.xlu0 %541
      %v543 = vsel %vm414, %v535, 0.0
      %544 = vadd.xlane.f32.xlu0 %v543
      %v545 = vpop.xlane.xlu0 %544
      %v546 = vsel %vm414, %v536, 0.0
      %547 = vadd.xlane.f32.xlu0 %v546
      %v548 = vpop.xlane.xlu0 %547
      %v549 = vmul.f32 %v539, %v524
      %v550 = vmul.f32 %v542, %v524
      %v551 = vmul.f32 %v545, %v524
      %v552 = vmul.f32 %v548, %v524
      %v553 = vadd.f32 %v549, 1e-05
      %v554 = vadd.f32 %v550, 1e-05
      %v555 = vadd.f32 %v551, 1e-05
      %v556 = vadd.f32 %v552, 1e-05
      %v557 = vrsqrt.pop %v553
      %v558 = vrsqrt.pop %v554
      %v559 = vrsqrt.pop %v555
      %v560 = vrsqrt.pop %v556
      %v561 = vmul.f32 %v529, %v557
      %v562 = vmul.f32 %v530, %v558
      %v563 = vmul.f32 %v531, %v559
      %v564 = vmul.f32 %v532, %v560
      %v565 = vld [vmem:[%s5] sm:$0x1]
      %v567 = vlaneseq
      %v568 = vshrl.u32 %v567, 7
      %v569 = vsub.s32 0, %v568
      %v570 = vrot.slane %v565, %v569
      %v572 = vmul.f32 %v561, %v570
      %v573 = vmul.f32 %v562, %v570
      %v574 = vmul.f32 %v563, %v570
      %v575 = vmul.f32 %v564, %v570
      %v576 = vld [vmem:[%s6] sm:$0x1]
      %v578 = vlaneseq
      %v579 = vshrl.u32 %v578, 7
      %v580 = vsub.s32 0, %v579
      %v581 = vrot.slane %v576, %v580
      %v583 = vadd.f32 %v572, %v581
      %v584 = vadd.f32 %v573, %v581
      %v585 = vadd.f32 %v574, %v581
      %v586 = vadd.f32 %v575, %v581
      %587 = vst.msk [vmem:[%s280] sm:$0xff] %vm414, %v583
      %588 = vst.msk [vmem:[%s280 + $0x8] sm:$0xff] %vm414, %v584
      %589 = vst.msk [vmem:[%s280 + $0x10] sm:$0xff] %vm414, %v585
      %590 = vst.msk [vmem:[%s280 + $0x18] sm:$0xff] %vm414, %v586
      %s591 = smul.u32 4, %s18
      %p592 = scmp.lt.s32.totalorder %s591, 7
      %s593 = scalar_select %p592, %s591, 7
      %s594 = smul.addr %s593, 8
      %s595 = scalar_lea.vmem %s7, %s594
      // Predicated region
      $region49: #{tpu_custom_call.1} parent=47 // pred_check
        %p596 = pneg %p188
      $region50: #{tpu_custom_call.1} parent=47 // pred_check_branch
        %598 = sbr.rel (%p596) target = $region52
      $region51: #{tpu_custom_call.1} parent=47 // pred_region
        %s599 = smul.u32 4, %s18
      $region52: #{tpu_custom_call.1} parent=47 // pred_fallthru
        _
    $region48: #{tpu_custom_call.1} parent=5 // pred_fallthru
      _
    %p600 = scmp.le.s32.totalorder 2, %s13
    // Predicated region
    $region53: #{tpu_custom_call.1} parent=5 // pred_check
      %p601 = pneg %p600
    $region54: #{tpu_custom_call.1} parent=5 // pred_check_branch
      %603 = sbr.rel (%p601) target = $region56
    $region55: #{tpu_custom_call.1} parent=5 // pred_region
      %s604 = ssub.s32 %s13, 2
      // Predicated region
      $region57: #{tpu_custom_call.1} parent=55 // pred_check
        %p605 = pneg %p194
      $region58: #{tpu_custom_call.1} parent=55 // pred_check_branch
        %607 = sbr.rel (%p605) target = $region60
      $region59: #{tpu_custom_call.1} parent=55 // pred_region
        %s608 = smul.u32 4, %s19
        %p609 = scmp.lt.s32.totalorder %s608, 7
        %s610 = scalar_select %p609, %s608, 7
        %s611 = smul.addr %s610, 8
        %s612 = scalar_lea.vmem %s7, %s611
      $region60: #{tpu_custom_call.1} parent=55 // pred_fallthru
        _
    $region56: #{tpu_custom_call.1} parent=5 // pred_fallthru
      _
  $region6: #{tpu_custom_call.1} parent=0 // loop_footer
    %s17 = sadd.s32 1, %s13
  $region7: #{tpu_custom_call.1} parent=0 // loop_footer_branch
    %12 = sbr.rel target = $region3
  $region8: #{tpu_custom_call.1} parent=0 // loop_exit
    _

</llo_original>
